<compile_context>
chip_gen: v6e
topology: v6e:2x2x1
jax: 0.10.0
libtpu: 0.0.40
codegen_flags: <defaults>
</compile_context>

<pallas_src>
import functools

import jax
import jax.numpy as jnp
import numpy as np
from jax.experimental import pallas as pl
from jax.experimental.pallas import tpu as pltpu

_MIB = 1024 * 1024


def _s2d_kernel(x_ref, o_ref, xt_ref, *, work_dtype):
    """space_to_depth for one (batch, row-tile) block.

    x_ref : (C, th, W)          input tile (batch dim squeezed)
    o_ref : (4*C, th//2, W//2)  output tile
    xt_ref: (W, C*(th//2))      persistent VMEM transpose scratch
    """
    C, th, W = x_ref.shape
    Hh, Wh = th // 2, W // 2

    for r in (0, 1):  # row parity: sublane-strided read straight off the ref
        xr = x_ref[:, pl.ds(r, Hh, stride=2), :].astype(work_dtype)   # (C, Hh, W)
        # Put W on the sublane axis so the column parity is also a plain
        # sublane-strided read (lane-strided loads are not supported on TPU).
        xt_ref[...] = xr.reshape(C * Hh, W).T                         # (W, C*Hh)
        for c in (0, 1):  # column parity
            xc = xt_ref[pl.ds(c, Wh, stride=2), :]                    # (Wh, C*Hh)
            g = r + 2 * c  # torch.cat order [ee, oe, eo, oo] -> g = r + 2*c
            o_ref[g * C:(g + 1) * C] = (
                xc.T.reshape(C, Hh, Wh).astype(o_ref.dtype))


def _vmem_capacity_bytes():
    """Physical VMEM per TensorCore (generation-aware, with safe fallbacks)."""
    try:
        cap = int(getattr(pltpu.get_tpu_info(), "vmem_capacity_bytes", 0) or 0)
        if cap > 0:
            return cap
    except Exception:
        pass
    try:
        kind = jax.devices()[0].device_kind.lower()
        if "7" in kind:          # v7x: 64 MiB per TensorCore
            return 64 * _MIB
    except Exception:
        pass
    return 128 * _MIB            # v5e / v6e


def _estimate_vmem_bytes(C, t, W, itemsize, work_itemsize):
    hh = t // 2
    rows = -(-W // 8) * 8
    cols = -(-(C * hh) // 128) * 128
    blocks = 4 * C * t * W * itemsize            # double-buffered in + out blocks
    scratch = rows * cols * work_itemsize        # (W, C*hh) transpose scratch
    transients = 2 * C * t * W * work_itemsize   # live transposed values (approx)
    return blocks + scratch + transients


def _pick_row_tile(N, C, H, W, itemsize, work_itemsize, budget_bytes):
    """Largest VMEM-fitting row tile th with sublane-aligned blocks
    (th % 16 == 0, 32 for 16-bit dtypes) that leaves >= 2 grid steps when
    N == 1 (keeps both v7x TensorCores busy)."""
    align = 32 if itemsize == 2 else (64 if itemsize == 1 else 16)
    cands = {H} | {t for t in range(align, H + 1, align) if H % t == 0}
    cands = sorted(cands)
    if N == 1:
        multi = [t for t in cands if H // t >= 2]
        if multi:
            cands = multi
    fitting = [t for t in cands
               if _estimate_vmem_bytes(C, t, W, itemsize, work_itemsize)
               <= budget_bytes]
    return max(fitting) if fitting else min(cands)


def space_to_depth(x):
    """Pallas TPU implementation of the PyTorch space_to_depth module (NCHW)."""
    N, C, H, W = x.shape
    assert H % 2 == 0 and W % 2 == 0, "H and W must be even"
    Hh, Wh = H // 2, W // 2

    dt = jnp.dtype(x.dtype)
    if dt.itemsize >= 4:
        work_dtype = x.dtype                 # f32 / i32 / u32: native, exact
    elif jnp.issubdtype(dt, jnp.floating):
        work_dtype = jnp.float32             # bf16 / f16: exact round trip
    else:
        work_dtype = jnp.int32               # i8 / u8 / bool: exact round trip
    work_itemsize = jnp.dtype(work_dtype).itemsize

    vmem_phys = _vmem_capacity_bytes()
    budget = 16 * _MIB if vmem_phys <= 64 * _MIB else 24 * _MIB
    th = _pick_row_tile(N, C, H, W, dt.itemsize, work_itemsize, budget)

    est = _estimate_vmem_bytes(C, th, W, dt.itemsize, work_itemsize)
    vmem_limit = int(min(vmem_phys * 3 // 4, max(2 * est, 32 * _MIB)))

    kernel = functools.partial(_s2d_kernel, work_dtype=work_dtype)

    grid_spec = pltpu.PrefetchScalarGridSpec(
        num_scalar_prefetch=0,
        grid=(N, H // th),
        in_specs=[pl.BlockSpec((None, C, th, W), lambda n, i: (n, 0, i, 0))],
        out_specs=pl.BlockSpec((None, 4 * C, th // 2, Wh),
                               lambda n, i: (n, 0, i, 0)),
        scratch_shapes=[pltpu.VMEM((W, C * (th // 2)), work_dtype)],
    )

    return pl.pallas_call(
        kernel,
        out_shape=jax.ShapeDtypeStruct((N, 4 * C, Hh, Wh), x.dtype),
        grid_spec=grid_spec,
        compiler_params=pltpu.CompilerParams(
            dimension_semantics=("parallel", "parallel"),
            vmem_limit_bytes=vmem_limit,
        ),
        cost_estimate=pl.CostEstimate(
            flops=0, transcendentals=0,
            bytes_accessed=2 * N * C * H * W * dt.itemsize),
    )(x)


if __name__ == "__main__":
    key = jax.random.PRNGKey(0)
    x = jax.random.normal(key, (2, 4, 16, 16), dtype=jnp.float32)  # NCHW

    out = jax.block_until_ready(space_to_depth(x))

    # Pure-JAX reference matching the PyTorch forward exactly.
    ref = jnp.concatenate(
        [x[..., ::2, ::2], x[..., 1::2, ::2], x[..., ::2, 1::2], x[..., 1::2, 1::2]],
        axis=1,
    )

    assert out.shape == ref.shape == (2, 16, 8, 8), (out.shape, ref.shape)
    # Pure data movement -> bit-exact.
    np.testing.assert_array_equal(np.asarray(out), np.asarray(ref))
    print("KERNEL_OK")
</pallas_src>

<mosaic_0001>
module attributes {stable_mosaic.version = 11 : i64} {
  func.func @_s2d_kernel(%arg0: i32, %arg1: i32, %arg2: memref<1x4x16x16xf32, #tpu.memory_space<vmem>>, %arg3: memref<1x16x8x8xf32, #tpu.memory_space<vmem>>, %arg4: memref<16x32xf32, #tpu.memory_space<vmem>>) attributes {dimension_semantics = [#tpu.dimension_semantics<parallel>, #tpu.dimension_semantics<parallel>], iteration_bounds = array<i64: 2, 1>, scalar_prefetch = 0 : i64, scratch_operands = 1 : i64, tpu.core_type = #tpu.core_type<tc>, window_params = [{transform_indices = @transform_0, window_bounds = array<i64: 1, 4, 16, 16>}, {transform_indices = @transform_1, window_bounds = array<i64: 1, 16, 8, 8>}]} {
    %c0 = arith.constant 0 : index
    %c0_0 = arith.constant 0 : index
    %c0_1 = arith.constant 0 : index
    %c0_2 = arith.constant 0 : index
    %0 = tpu.strided_load %arg2[%c0, %c0_0, %c0_1, %c0_2] {strides = array<i32: 1, 1, 2, 1>} : memref<1x4x16x16xf32, #tpu.memory_space<vmem>>, vector<1x4x8x16xf32>
    %1 = vector.shape_cast %0 : vector<1x4x8x16xf32> to vector<4x8x16xf32>
    %2 = vector.shape_cast %1 : vector<4x8x16xf32> to vector<32x16xf32>
    %3 = tpu.transpose %2, [1, 0] : vector<32x16xf32> -> vector<16x32xf32>
    %c0_3 = arith.constant 0 : index
    %c0_4 = arith.constant 0 : index
    %4 = vector.load %arg4[%c0_3, %c0_4] : memref<16x32xf32, #tpu.memory_space<vmem>>, vector<16x32xf32>
    tpu.vector_store %arg4[%c0_3, %c0_4], %3 {strides = array<i32>} : memref<16x32xf32, #tpu.memory_space<vmem>>, vector<16x32xf32>,
    %c0_5 = arith.constant 0 : index
    %c0_6 = arith.constant 0 : index
    %5 = tpu.strided_load %arg4[%c0_5, %c0_6] {strides = array<i32: 2, 1>} : memref<16x32xf32, #tpu.memory_space<vmem>>, vector<8x32xf32>
    %6 = tpu.transpose %5, [1, 0] : vector<8x32xf32> -> vector<32x8xf32>
    %7 = vector.shape_cast %6 : vector<32x8xf32> to vector<4x8x8xf32>
    %c0_7 = arith.constant 0 : index
    %c0_8 = arith.constant 0 : index
    %c0_9 = arith.constant 0 : index
    %c0_10 = arith.constant 0 : index
    %8 = vector.load %arg3[%c0_7, %c0_8, %c0_9, %c0_10] : memref<1x16x8x8xf32, #tpu.memory_space<vmem>>, vector<1x4x8x8xf32>
    %9 = vector.shape_cast %8 : vector<1x4x8x8xf32> to vector<4x8x8xf32>
    %10 = vector.shape_cast %7 : vector<4x8x8xf32> to vector<1x4x8x8xf32>
    tpu.vector_store %arg3[%c0_7, %c0_8, %c0_9, %c0_10], %10 {strides = array<i32>} : memref<1x16x8x8xf32, #tpu.memory_space<vmem>>, vector<1x4x8x8xf32>,
    %c1 = arith.constant 1 : index
    %c0_11 = arith.constant 0 : index
    %11 = tpu.strided_load %arg4[%c1, %c0_11] {strides = array<i32: 2, 1>} : memref<16x32xf32, #tpu.memory_space<vmem>>, vector<8x32xf32>
    %12 = tpu.transpose %11, [1, 0] : vector<8x32xf32> -> vector<32x8xf32>
    %13 = vector.shape_cast %12 : vector<32x8xf32> to vector<4x8x8xf32>
    %c0_12 = arith.constant 0 : index
    %c8 = arith.constant 8 : index
    %c0_13 = arith.constant 0 : index
    %c0_14 = arith.constant 0 : index
    %14 = vector.load %arg3[%c0_12, %c8, %c0_13, %c0_14] : memref<1x16x8x8xf32, #tpu.memory_space<vmem>>, vector<1x4x8x8xf32>
    %15 = vector.shape_cast %14 : vector<1x4x8x8xf32> to vector<4x8x8xf32>
    %16 = vector.shape_cast %13 : vector<4x8x8xf32> to vector<1x4x8x8xf32>
    tpu.vector_store %arg3[%c0_12, %c8, %c0_13, %c0_14], %16 {strides = array<i32>} : memref<1x16x8x8xf32, #tpu.memory_space<vmem>>, vector<1x4x8x8xf32>,
    %c0_15 = arith.constant 0 : index
    %c0_16 = arith.constant 0 : index
    %c1_17 = arith.constant 1 : index
    %c0_18 = arith.constant 0 : index
    %17 = tpu.strided_load %arg2[%c0_15, %c0_16, %c1_17, %c0_18] {strides = array<i32: 1, 1, 2, 1>} : memref<1x4x16x16xf32, #tpu.memory_space<vmem>>, vector<1x4x8x16xf32>
    %18 = vector.shape_cast %17 : vector<1x4x8x16xf32> to vector<4x8x16xf32>
    %19 = vector.shape_cast %18 : vector<4x8x16xf32> to vector<32x16xf32>
    %20 = tpu.transpose %19, [1, 0] : vector<32x16xf32> -> vector<16x32xf32>
    %c0_19 = arith.constant 0 : index
    %c0_20 = arith.constant 0 : index
    %21 = vector.load %arg4[%c0_19, %c0_20] : memref<16x32xf32, #tpu.memory_space<vmem>>, vector<16x32xf32>
    tpu.vector_store %arg4[%c0_19, %c0_20], %20 {strides = array<i32>} : memref<16x32xf32, #tpu.memory_space<vmem>>, vector<16x32xf32>,
    %c0_21 = arith.constant 0 : index
    %c0_22 = arith.constant 0 : index
    %22 = tpu.strided_load %arg4[%c0_21, %c0_22] {strides = array<i32: 2, 1>} : memref<16x32xf32, #tpu.memory_space<vmem>>, vector<8x32xf32>
    %23 = tpu.transpose %22, [1, 0] : vector<8x32xf32> -> vector<32x8xf32>
    %24 = vector.shape_cast %23 : vector<32x8xf32> to vector<4x8x8xf32>
    %c0_23 = arith.constant 0 : index
    %c4 = arith.constant 4 : index
    %c0_24 = arith.constant 0 : index
    %c0_25 = arith.constant 0 : index
    %25 = vector.load %arg3[%c0_23, %c4, %c0_24, %c0_25] : memref<1x16x8x8xf32, #tpu.memory_space<vmem>>, vector<1x4x8x8xf32>
    %26 = vector.shape_cast %25 : vector<1x4x8x8xf32> to vector<4x8x8xf32>
    %27 = vector.shape_cast %24 : vector<4x8x8xf32> to vector<1x4x8x8xf32>
    tpu.vector_store %arg3[%c0_23, %c4, %c0_24, %c0_25], %27 {strides = array<i32>} : memref<1x16x8x8xf32, #tpu.memory_space<vmem>>, vector<1x4x8x8xf32>,
    %c1_26 = arith.constant 1 : index
    %c0_27 = arith.constant 0 : index
    %28 = tpu.strided_load %arg4[%c1_26, %c0_27] {strides = array<i32: 2, 1>} : memref<16x32xf32, #tpu.memory_space<vmem>>, vector<8x32xf32>
    %29 = tpu.transpose %28, [1, 0] : vector<8x32xf32> -> vector<32x8xf32>
    %30 = vector.shape_cast %29 : vector<32x8xf32> to vector<4x8x8xf32>
    %c0_28 = arith.constant 0 : index
    %c12 = arith.constant 12 : index
    %c0_29 = arith.constant 0 : index
    %c0_30 = arith.constant 0 : index
    %31 = vector.load %arg3[%c0_28, %c12, %c0_29, %c0_30] : memref<1x16x8x8xf32, #tpu.memory_space<vmem>>, vector<1x4x8x8xf32>
    %32 = vector.shape_cast %31 : vector<1x4x8x8xf32> to vector<4x8x8xf32>
    %33 = vector.shape_cast %30 : vector<4x8x8xf32> to vector<1x4x8x8xf32>
    tpu.vector_store %arg3[%c0_28, %c12, %c0_29, %c0_30], %33 {strides = array<i32>} : memref<1x16x8x8xf32, #tpu.memory_space<vmem>>, vector<1x4x8x8xf32>,
    return
  }
  func.func @transform_0(%arg0: i32, %arg1: i32) -> (i32, i32, i32, i32) {
    %c0_i32 = arith.constant 0 : i32
    %c0_i32_0 = arith.constant 0 : i32
    %c0_i32_1 = arith.constant 0 : i32
    return %arg0, %c0_i32, %arg1, %c0_i32_0 : i32, i32, i32, i32
  }
  func.func @transform_1(%arg0: i32, %arg1: i32) -> (i32, i32, i32, i32) {
    %c0_i32 = arith.constant 0 : i32
    %c0_i32_0 = arith.constant 0 : i32
    %c0_i32_1 = arith.constant 0 : i32
    return %arg0, %c0_i32, %arg1, %c0_i32_0 : i32, i32, i32, i32
  }
}

</mosaic_0001>

<llo_original>
// kernel: tpu_custom_call.1
$region0: #{tpu_custom_call.1}
  #allocation0 [shape = 'u32[]', space=smem, size = 0x4, offset = 0x4, fixed_abs, tag = 'smem constant byte address 0x4 - core index']
  #allocation1 [shape = 'u32[144,128]{1,0:T(1,128)}', space=vmem, size = 0x12000, scoped, tag = 'internal scratch']
  #allocation2 [shape = 'f32[16,32]{1,0:T(8,128)}', space=vmem, size = 0x2000, scoped, tag = 'scratch operand']
  %s0 = inlined_call_operand.hbm [shape: f32[2,4,16,16], index: 0, kind: input, shape index: {}]
  %s1 = inlined_call_operand.vmem [shape: f32[2,16,8,8], index: 1, kind: output, shape index: {}]
  %s2 = sld [smem:[#allocation0]]
  $region41: #{tpu_custom_call.1} parent=0
    _
  %s4 = ssub.s32 1, %s2
  %s5 = scalar_select 0, %s4, %s2
  $region1: #{tpu_custom_call.1} parent=0
    #allocation3 [shape = 'u8[65536]{0}', space=vmem, size = 0x10000, scoped, tag = 'input window, operand 0']
    #allocation4 [shape = 's32[2]{0}', space=sflag, size = 0x8, scoped, tag = 'scoped memory for tpu_custom_call.1']
    %6 = vsyncpa [#allocation4], 0
    %s7 = scalar_lea.sflag [#allocation4], 1
    %8 = vsyncpa %s7, 0
    loop: start=0, step=1, limit=4
    $region2: #{tpu_custom_call.1} parent=1 // loop_pre_header
      _
    $region3: #{tpu_custom_call.1} parent=1 // loop_header
      %s10 = sphi 0, %s14
      %p11 = scmp.ge.s32.totalorder %s10, 4
      %s17 = sphi 0, %s29
      %s18 = sphi 0, %s25
      %s19 = sphi 0, %s17
      %s20 = sphi 0, %s18
      %s21 = sphi 0, %s19
      %s22 = sphi 0, %s20
      %s34 = sphi 0, %s36
      %s37 = sphi 0, %s34
      %s38 = sphi 0, %s37
      %s54 = sphi 0, %s38
      %s62 = sphi 0, %s64
      %s65 = sphi 0, %s62
      %s66 = sphi 0, %s65
      %s82 = sphi 0, %s66
    $region4: #{tpu_custom_call.1} parent=1 // loop_header_branch
      %13 = sbr.rel (%p11) target = $region8
    $region5: #{tpu_custom_call.1} parent=1 // loop_body
      %s15 = ssub.s32 %s10, 1
      %s16 = ssub.s32 %s10, 2
      %s23 = sadd.s32 1, %s18
      %p24 = scmp.ge.s32.totalorder %s23, 1
      %s25 = scalar_select %p24, 0, %s23
      %s26 = sadd.s32 1, %s17
      %s27 = scalar_select %p24, %s26, %s17
      %p28 = scmp.ge.s32.totalorder %s27, 2
      %s29 = scalar_select %p28, 0, %s27
      %s30 = ssub.s32 %s17, %s29
      %s31 = ssub.s32 %s18, %s25
      %s32 = sor.u32 %s30, %s31
      %p33 = scmp.eq.s32.totalorder %s32, 0
      %s35 = sadd.s32 %s34, 1
      %s36 = scalar_select %p33, %s34, %s35
      %p39 = pneg %p33
      %p40 = scmp.eq.s32.totalorder %s10, 1
      %p41 = por %p39, %p40
      %p42 = scmp.ne.s32.totalorder %s34, %s37
      %p43 = scmp.eq.s32.totalorder %s10, 0
      %p44 = por %p42, %p43
      %p45 = scmp.ne.s32.totalorder %s34, %s37
      %p46 = scmp.eq.s32.totalorder %s15, 1
      %p47 = por %p45, %p46
      %p48 = scmp.ne.s32.totalorder %s37, %s38
      %p49 = scmp.eq.s32.totalorder %s15, 0
      %p50 = por %p48, %p49
      %p51 = scmp.ne.s32.totalorder %s37, %s38
      %p52 = scmp.eq.s32.totalorder %s16, 1
      %p53 = por %p51, %p52
      %p55 = scmp.ne.s32.totalorder %s38, %s54
      %p56 = scmp.eq.s32.totalorder %s16, 0
      %p57 = por %p55, %p56
      %s58 = ssub.s32 %s17, %s29
      %s59 = ssub.s32 %s18, %s25
      %s60 = sor.u32 %s58, %s59
      %p61 = scmp.eq.s32.totalorder %s60, 0
      %s63 = sadd.s32 %s62, 1
      %s64 = scalar_select %p61, %s62, %s63
      %p67 = pneg %p61
      %p68 = scmp.eq.s32.totalorder %s10, 1
      %p69 = por %p67, %p68
      %p70 = scmp.ne.s32.totalorder %s62, %s65
      %p71 = scmp.eq.s32.totalorder %s10, 0
      %p72 = por %p70, %p71
      %p73 = scmp.ne.s32.totalorder %s62, %s65
      %p74 = scmp.eq.s32.totalorder %s15, 1
      %p75 = por %p73, %p74
      %p76 = scmp.ne.s32.totalorder %s65, %s66
      %p77 = scmp.eq.s32.totalorder %s15, 0
      %p78 = por %p76, %p77
      %p79 = scmp.ne.s32.totalorder %s65, %s66
      %p80 = scmp.eq.s32.totalorder %s16, 1
      %p81 = por %p79, %p80
      %p83 = scmp.ne.s32.totalorder %s66, %s82
      %p84 = scmp.eq.s32.totalorder %s16, 0
      %p85 = por %p83, %p84
      %p86 = scmp.le.s32.totalorder 1, %s10
      %p87 = scmp.lt.s32.totalorder %s10, 3
      %p88 = pnand %p86, %p87
      %p89 = pneg %p88
      // Predicated region
      $region9: #{tpu_custom_call.1} parent=5 // pred_check
        _
      $region10: #{tpu_custom_call.1} parent=5 // pred_check_branch
        %91 = sbr.rel (%p88) target = $region12
      $region11: #{tpu_custom_call.1} parent=5 // pred_region
        %s92 = ssub.s32 %s10, 1
      $region12: #{tpu_custom_call.1} parent=5 // pred_fallthru
        _
      %p93 = scmp.lt.s32.totalorder %s10, 2
      // Predicated region
      $region13: #{tpu_custom_call.1} parent=5 // pred_check
        %p94 = pneg %p93
      $region14: #{tpu_custom_call.1} parent=5 // pred_check_branch
        %96 = sbr.rel (%p94) target = $region16
      $region15: #{tpu_custom_call.1} parent=5 // pred_region
        // Predicated region
        $region17: #{tpu_custom_call.1} parent=15 // pred_check
          %p97 = pneg %p44
        $region18: #{tpu_custom_call.1} parent=15 // pred_check_branch
          %99 = sbr.rel (%p97) target = $region20
        $region19: #{tpu_custom_call.1} parent=15 // pred_region
          %s100 = sand.u32 %s34, 1
          %s101 = scalar_lea.sflag [#allocation4], %s100
          %s102 = sand.u32 %s34, 1
          %s103 = smul.addr %s102, 64
          %s104 = scalar_lea.vmem [#allocation3], %s103
          %s105 = smul.u32 2, %s18
          %s107 = ssub.s32 1024, 1024
          %108 = vsyncadd %s101, %s107
          %s109 = smul.addr %s17, 8
          %s110 = sadd.s32 %s105, %s109
          %s111 = smul.addr %s110, 128
          %s112 = scalar_lea.hbm %s0, %s111
          %s113 = sshll.u32 %s104, 4
          %s114 = int_to_ptr.vmem [resolvable:$true] %s113
          %119 = dma.hbm_to_vmem [thread:$0]  %s112, 1024, %s114, %s101, 128, 128, 8
        $region20: #{tpu_custom_call.1} parent=15 // pred_fallthru
          _
      $region16: #{tpu_custom_call.1} parent=5 // pred_fallthru
        _
      %p120 = scmp.le.s32.totalorder 1, %s10
      %p121 = scmp.lt.s32.totalorder %s10, 3
      %p122 = pnand %p120, %p121
      %p123 = pneg %p122
      // Predicated region
      $region21: #{tpu_custom_call.1} parent=5 // pred_check
        _
      $region22: #{tpu_custom_call.1} parent=5 // pred_check_branch
        %125 = sbr.rel (%p122) target = $region24
      $region23: #{tpu_custom_call.1} parent=5 // pred_region
        %s126 = ssub.s32 %s10, 1
        %s127 = sand.u32 %s37, 1
        %s128 = scalar_lea.sflag [#allocation4], %s127
        %s129 = sand.u32 %s37, 1
        %s130 = smul.addr %s129, 64
        %s131 = scalar_lea.vmem [#allocation3], %s130
        // Predicated region
        $region25: #{tpu_custom_call.1} parent=23 // pred_check
          %p132 = pneg %p50
        $region26: #{tpu_custom_call.1} parent=23 // pred_check_branch
          %134 = sbr.rel (%p132) target = $region28
        $region27: #{tpu_custom_call.1} parent=23 // pred_region
          %135 = dma.done %s128, 1024
        $region28: #{tpu_custom_call.1} parent=23 // pred_fallthru
          _
        %s136 = sand.u32 %s37, 1
        %s137 = scalar_lea.sflag [#allocation4], %s136
        %s138 = sand.u32 %s37, 1
        %s139 = smul.addr %s138, 64
        %s140 = scalar_lea.vmem [#allocation3], %s139
        %p141 = pneg %p50
        %p142 = pneg %p47
        %p143 = pneg %p78
        %p144 = pneg %p75
        %p145 = scmp.lt.s32.totalorder %s19, 1
        %s146 = scalar_select %p145, %s19, 1
        %p147 = scmp.lt.s32.totalorder %s20, 0
        %s148 = scalar_select %p147, %s20, 0
        %s149 = smul.addr %s146, 16
        %s150 = sadd.s32 %s148, %s149
        %s151 = smul.addr %s150, 8
        %s152 = scalar_lea.vmem %s1, %s151
        %s153 = smul.u32 2, %s20
        %p154 = scmp.lt.s32.totalorder %s19, 1
        %s155 = scalar_select %p154, %s19, 1
        %p156 = scmp.lt.s32.totalorder %s20, 0
        %s157 = scalar_select %p156, %s20, 0
        %s158 = smul.addr %s155, 16
        %s159 = sadd.s32 %s157, %s158
        %s160 = smul.addr %s159, 8
        %s161 = scalar_lea.vmem %s1, %s160
        %v162 = vld [vmem:[%s131] ss:$2 sm:$0xff]
        %s163 = scalar_lea.vmem %s131, 16 [#allocation3]
        %v164 = vld [vmem:[%s163] ss:$2 sm:$0xff]
        %s165 = scalar_lea.vmem %s131, 32 [#allocation3]
        %v166 = vld [vmem:[%s165] ss:$2 sm:$0xff]
        %s167 = scalar_lea.vmem %s131, 48 [#allocation3]
        %v168 = vld [vmem:[%s167] ss:$2 sm:$0xff]
        %169 = vxpose.xlu0.b32.start [1/16] %v162, 128
        %170 = vxpose.xlu0.b32.cont [2/16] %v164, 128
        %171 = vxpose.xlu0.b32.cont [3/16] %v166, 128
        %172 = vxpose.xlu0.b32.cont [4/16] %v168, 128
        %173 = vxpose.xlu0.b32.cont [5/16] 0.0, 128
        %174 = vxpose.xlu0.b32.cont [6/16] 0.0, 128
        %175 = vxpose.xlu0.b32.cont [7/16] 0.0, 128
        %176 = vxpose.xlu0.b32.cont [8/16] 0.0, 128
        %177 = vxpose.xlu0.b32.cont [9/16] 0.0, 128
        %178 = vxpose.xlu0.b32.cont [10/16] 0.0, 128
        %179 = vxpose.xlu0.b32.cont [11/16] 0.0, 128
        %180 = vxpose.xlu0.b32.cont [12/16] 0.0, 128
        %181 = vxpose.xlu0.b32.cont [13/16] 0.0, 128
        %182 = vxpose.xlu0.b32.cont [14/16] 0.0, 128
        %183 = vxpose.xlu0.b32.cont [15/16] 0.0, 128
        %184 = vxpose.xlu0.b32.end [16/16] 0.0, 128
        %v185 = vpop.trf.xlu0
        %v186 = vpop.trf.xlu0
        %v187 = vpop.trf.xlu0
        %v188 = vpop.trf.xlu0
        %v189 = vpop.trf.xlu0
        %v190 = vpop.trf.xlu0
        %v191 = vpop.trf.xlu0
        %v192 = vpop.trf.xlu0
        %v193 = vpop.trf.xlu0
        %v194 = vpop.trf.xlu0
        %v195 = vpop.trf.xlu0
        %v196 = vpop.trf.xlu0
        %v197 = vpop.trf.xlu0
        %v198 = vpop.trf.xlu0
        %v199 = vpop.trf.xlu0
        %v200 = vpop.trf.xlu0
        %vm201 = vcmask 261120
        %202 = vst.msk [vmem:[#allocation2] sm:$0xff] %vm201, %v185
        %203 = vst.msk [vmem:[#allocation2 + $0x8] sm:$0xff] %vm201, %v186
        %v204 = vld [vmem:[#allocation2] ss:$2 sm:$0xff]
        %205 = vxpose.xlu0.b32.start [1/16] %v204, 128
        %206 = vxpose.xlu0.b32.cont [2/16] 0.0, 128
        %207 = vxpose.xlu0.b32.cont [3/16] 0.0, 128
        %208 = vxpose.xlu0.b32.cont [4/16] 0.0, 128
        %209 = vxpose.xlu0.b32.cont [5/16] 0.0, 128
        %210 = vxpose.xlu0.b32.cont [6/16] 0.0, 128
        %211 = vxpose.xlu0.b32.cont [7/16] 0.0, 128
        %212 = vxpose.xlu0.b32.cont [8/16] 0.0, 128
        %213 = vxpose.xlu0.b32.cont [9/16] 0.0, 128
        %214 = vxpose.xlu0.b32.cont [10/16] 0.0, 128
        %215 = vxpose.xlu0.b32.cont [11/16] 0.0, 128
        %216 = vxpose.xlu0.b32.cont [12/16] 0.0, 128
        %217 = vxpose.xlu0.b32.cont [13/16] 0.0, 128
        %218 = vxpose.xlu0.b32.cont [14/16] 0.0, 128
        %219 = vxpose.xlu0.b32.cont [15/16] 0.0, 128
        %220 = vxpose.xlu0.b32.end [16/16] 0.0, 128
        %v221 = vpop.trf.xlu0
        %v222 = vpop.trf.xlu0
        %v223 = vpop.trf.xlu0
        %v224 = vpop.trf.xlu0
        %v225 = vpop.trf.xlu0
        %v226 = vpop.trf.xlu0
        %v227 = vpop.trf.xlu0
        %v228 = vpop.trf.xlu0
        %v229 = vpop.trf.xlu0
        %v230 = vpop.trf.xlu0
        %v231 = vpop.trf.xlu0
        %v232 = vpop.trf.xlu0
        %v233 = vpop.trf.xlu0
        %v234 = vpop.trf.xlu0
        %v235 = vpop.trf.xlu0
        %v236 = vpop.trf.xlu0
        %vm237 = vcmask 64512
        %238 = vst.msk [vmem:[%s161] sm:$0xff] %vm237, %v221
        %239 = vst.msk [vmem:[%s161 + $0x8] sm:$0xff] %vm237, %v222
        %240 = vst.msk [vmem:[%s161 + $0x10] sm:$0xff] %vm237, %v223
        %241 = vst.msk [vmem:[%s161 + $0x18] sm:$0xff] %vm237, %v224
        %s242 = scalar_lea.vmem [#allocation2], 1
        %v243 = vld [vmem:[%s242] ss:$2 sm:$0xff]
        %244 = vxpose.xlu0.b32.start [1/16] %v243, 128
        %245 = vxpose.xlu0.b32.cont [2/16] 0.0, 128
        %246 = vxpose.xlu0.b32.cont [3/16] 0.0, 128
        %247 = vxpose.xlu0.b32.cont [4/16] 0.0, 128
        %248 = vxpose.xlu0.b32.cont [5/16] 0.0, 128
        %249 = vxpose.xlu0.b32.cont [6/16] 0.0, 128
        %250 = vxpose.xlu0.b32.cont [7/16] 0.0, 128
        %251 = vxpose.xlu0.b32.cont [8/16] 0.0, 128
        %252 = vxpose.xlu0.b32.cont [9/16] 0.0, 128
        %253 = vxpose.xlu0.b32.cont [10/16] 0.0, 128
        %254 = vxpose.xlu0.b32.cont [11/16] 0.0, 128
        %255 = vxpose.xlu0.b32.cont [12/16] 0.0, 128
        %256 = vxpose.xlu0.b32.cont [13/16] 0.0, 128
        %257 = vxpose.xlu0.b32.cont [14/16] 0.0, 128
        %258 = vxpose.xlu0.b32.cont [15/16] 0.0, 128
        %259 = vxpose.xlu0.b32.end [16/16] 0.0, 128
        %v260 = vpop.trf.xlu0
        %v261 = vpop.trf.xlu0
        %v262 = vpop.trf.xlu0
        %v263 = vpop.trf.xlu0
        %v264 = vpop.trf.xlu0
        %v265 = vpop.trf.xlu0
        %v266 = vpop.trf.xlu0
        %v267 = vpop.trf.xlu0
        %v268 = vpop.trf.xlu0
        %v269 = vpop.trf.xlu0
        %v270 = vpop.trf.xlu0
        %v271 = vpop.trf.xlu0
        %v272 = vpop.trf.xlu0
        %v273 = vpop.trf.xlu0
        %v274 = vpop.trf.xlu0
        %v275 = vpop.trf.xlu0
        %s276 = scalar_lea.vmem %s161, 64
        %277 = vst.msk [vmem:[%s276] sm:$0xff] %vm237, %v260
        %278 = vst.msk [vmem:[%s276 + $0x8] sm:$0xff] %vm237, %v261
        %279 = vst.msk [vmem:[%s276 + $0x10] sm:$0xff] %vm237, %v262
        %280 = vst.msk [vmem:[%s276 + $0x18] sm:$0xff] %vm237, %v263
        %s281 = scalar_lea.vmem %s131, 1 [#allocation3]
        %v282 = vld [vmem:[%s281] ss:$2 sm:$0xff]
        %s283 = scalar_lea.vmem %s131, 17 [#allocation3]
        %v284 = vld [vmem:[%s283] ss:$2 sm:$0xff]
        %s285 = scalar_lea.vmem %s131, 33 [#allocation3]
        %v286 = vld [vmem:[%s285] ss:$2 sm:$0xff]
        %s287 = scalar_lea.vmem %s131, 49 [#allocation3]
        %v288 = vld [vmem:[%s287] ss:$2 sm:$0xff]
        %289 = vxpose.xlu0.b32.start [1/16] %v282, 128
        %290 = vxpose.xlu0.b32.cont [2/16] %v284, 128
        %291 = vxpose.xlu0.b32.cont [3/16] %v286, 128
        %292 = vxpose.xlu0.b32.cont [4/16] %v288, 128
        %293 = vxpose.xlu0.b32.cont [5/16] 0.0, 128
        %294 = vxpose.xlu0.b32.cont [6/16] 0.0, 128
        %295 = vxpose.xlu0.b32.cont [7/16] 0.0, 128
        %296 = vxpose.xlu0.b32.cont [8/16] 0.0, 128
        %297 = vxpose.xlu0.b32.cont [9/16] 0.0, 128
        %298 = vxpose.xlu0.b32.cont [10/16] 0.0, 128
        %299 = vxpose.xlu0.b32.cont [11/16] 0.0, 128
        %300 = vxpose.xlu0.b32.cont [12/16] 0.0, 128
        %301 = vxpose.xlu0.b32.cont [13/16] 0.0, 128
        %302 = vxpose.xlu0.b32.cont [14/16] 0.0, 128
        %303 = vxpose.xlu0.b32.cont [15/16] 0.0, 128
        %304 = vxpose.xlu0.b32.end [16/16] 0.0, 128
        %v305 = vpop.trf.xlu0
        %v306 = vpop.trf.xlu0
        %v307 = vpop.trf.xlu0
        %v308 = vpop.trf.xlu0
        %v309 = vpop.trf.xlu0
        %v310 = vpop.trf.xlu0
        %v311 = vpop.trf.xlu0
        %v312 = vpop.trf.xlu0
        %v313 = vpop.trf.xlu0
        %v314 = vpop.trf.xlu0
        %v315 = vpop.trf.xlu0
        %v316 = vpop.trf.xlu0
        %v317 = vpop.trf.xlu0
        %v318 = vpop.trf.xlu0
        %v319 = vpop.trf.xlu0
        %v320 = vpop.trf.xlu0
        %321 = vst.msk [vmem:[#allocation2] sm:$0xff] %vm201, %v305
        %322 = vst.msk [vmem:[#allocation2 + $0x8] sm:$0xff] %vm201, %v306
        %v323 = vld [vmem:[#allocation2] ss:$2 sm:$0xff]
        %324 = vxpose.xlu0.b32.start [1/16] %v323, 128
        %325 = vxpose.xlu0.b32.cont [2/16] 0.0, 128
        %326 = vxpose.xlu0.b32.cont [3/16] 0.0, 128
        %327 = vxpose.xlu0.b32.cont [4/16] 0.0, 128
        %328 = vxpose.xlu0.b32.cont [5/16] 0.0, 128
        %329 = vxpose.xlu0.b32.cont [6/16] 0.0, 128
        %330 = vxpose.xlu0.b32.cont [7/16] 0.0, 128
        %331 = vxpose.xlu0.b32.cont [8/16] 0.0, 128
        %332 = vxpose.xlu0.b32.cont [9/16] 0.0, 128
        %333 = vxpose.xlu0.b32.cont [10/16] 0.0, 128
        %334 = vxpose.xlu0.b32.cont [11/16] 0.0, 128
        %335 = vxpose.xlu0.b32.cont [12/16] 0.0, 128
        %336 = vxpose.xlu0.b32.cont [13/16] 0.0, 128
        %337 = vxpose.xlu0.b32.cont [14/16] 0.0, 128
        %338 = vxpose.xlu0.b32.cont [15/16] 0.0, 128
        %339 = vxpose.xlu0.b32.end [16/16] 0.0, 128
        %v340 = vpop.trf.xlu0
        %v341 = vpop.trf.xlu0
        %v342 = vpop.trf.xlu0
        %v343 = vpop.trf.xlu0
        %v344 = vpop.trf.xlu0
        %v345 = vpop.trf.xlu0
        %v346 = vpop.trf.xlu0
        %v347 = vpop.trf.xlu0
        %v348 = vpop.trf.xlu0
        %v349 = vpop.trf.xlu0
        %v350 = vpop.trf.xlu0
        %v351 = vpop.trf.xlu0
        %v352 = vpop.trf.xlu0
        %v353 = vpop.trf.xlu0
        %v354 = vpop.trf.xlu0
        %v355 = vpop.trf.xlu0
        %s356 = scalar_lea.vmem %s161, 32
        %357 = vst.msk [vmem:[%s356] sm:$0xff] %vm237, %v340
        %358 = vst.msk [vmem:[%s356 + $0x8] sm:$0xff] %vm237, %v341
        %359 = vst.msk [vmem:[%s356 + $0x10] sm:$0xff] %vm237, %v342
        %360 = vst.msk [vmem:[%s356 + $0x18] sm:$0xff] %vm237, %v343
        %v361 = vld [vmem:[%s242] ss:$2 sm:$0xff]
        %362 = vxpose.xlu0.b32.start [1/16] %v361, 128
        %363 = vxpose.xlu0.b32.cont [2/16] 0.0, 128
        %364 = vxpose.xlu0.b32.cont [3/16] 0.0, 128
        %365 = vxpose.xlu0.b32.cont [4/16] 0.0, 128
        %366 = vxpose.xlu0.b32.cont [5/16] 0.0, 128
        %367 = vxpose.xlu0.b32.cont [6/16] 0.0, 128
        %368 = vxpose.xlu0.b32.cont [7/16] 0.0, 128
        %369 = vxpose.xlu0.b32.cont [8/16] 0.0, 128
        %370 = vxpose.xlu0.b32.cont [9/16] 0.0, 128
        %371 = vxpose.xlu0.b32.cont [10/16] 0.0, 128
        %372 = vxpose.xlu0.b32.cont [11/16] 0.0, 128
        %373 = vxpose.xlu0.b32.cont [12/16] 0.0, 128
        %374 = vxpose.xlu0.b32.cont [13/16] 0.0, 128
        %375 = vxpose.xlu0.b32.cont [14/16] 0.0, 128
        %376 = vxpose.xlu0.b32.cont [15/16] 0.0, 128
        %377 = vxpose.xlu0.b32.end [16/16] 0.0, 128
        %v378 = vpop.trf.xlu0
        %v379 = vpop.trf.xlu0
        %v380 = vpop.trf.xlu0
        %v381 = vpop.trf.xlu0
        %v382 = vpop.trf.xlu0
        %v383 = vpop.trf.xlu0
        %v384 = vpop.trf.xlu0
        %v385 = vpop.trf.xlu0
        %v386 = vpop.trf.xlu0
        %v387 = vpop.trf.xlu0
        %v388 = vpop.trf.xlu0
        %v389 = vpop.trf.xlu0
        %v390 = vpop.trf.xlu0
        %v391 = vpop.trf.xlu0
        %v392 = vpop.trf.xlu0
        %v393 = vpop.trf.xlu0
        %s394 = scalar_lea.vmem %s161, 96
        %395 = vst.msk [vmem:[%s394] sm:$0xff] %vm237, %v378
        %396 = vst.msk [vmem:[%s394 + $0x8] sm:$0xff] %vm237, %v379
        %397 = vst.msk [vmem:[%s394 + $0x10] sm:$0xff] %vm237, %v380
        %398 = vst.msk [vmem:[%s394 + $0x18] sm:$0xff] %vm237, %v381
        %p399 = scmp.lt.s32.totalorder %s19, 1
        %s400 = scalar_select %p399, %s19, 1
        %p401 = scmp.lt.s32.totalorder %s20, 0
        %s402 = scalar_select %p401, %s20, 0
        %s403 = smul.addr %s400, 16
        %s404 = sadd.s32 %s402, %s403
        %s405 = smul.addr %s404, 8
        %s406 = scalar_lea.vmem %s1, %s405
        // Predicated region
        $region29: #{tpu_custom_call.1} parent=23 // pred_check
          %p407 = pneg %p75
        $region30: #{tpu_custom_call.1} parent=23 // pred_check_branch
          %409 = sbr.rel (%p407) target = $region32
        $region31: #{tpu_custom_call.1} parent=23 // pred_region
          _
        $region32: #{tpu_custom_call.1} parent=23 // pred_fallthru
          _
      $region24: #{tpu_custom_call.1} parent=5 // pred_fallthru
        _
      %p410 = scmp.le.s32.totalorder 2, %s10
      // Predicated region
      $region33: #{tpu_custom_call.1} parent=5 // pred_check
        %p411 = pneg %p410
      $region34: #{tpu_custom_call.1} parent=5 // pred_check_branch
        %413 = sbr.rel (%p411) target = $region36
      $region35: #{tpu_custom_call.1} parent=5 // pred_region
        %s414 = ssub.s32 %s10, 2
        // Predicated region
        $region37: #{tpu_custom_call.1} parent=35 // pred_check
          %p415 = pneg %p81
        $region38: #{tpu_custom_call.1} parent=35 // pred_check_branch
          %417 = sbr.rel (%p415) target = $region40
        $region39: #{tpu_custom_call.1} parent=35 // pred_region
          %p418 = scmp.lt.s32.totalorder %s21, 1
          %s419 = scalar_select %p418, %s21, 1
          %p420 = scmp.lt.s32.totalorder %s22, 0
          %s421 = scalar_select %p420, %s22, 0
          %s422 = smul.addr %s419, 16
          %s423 = sadd.s32 %s421, %s422
          %s424 = smul.addr %s423, 8
          %s425 = scalar_lea.vmem %s1, %s424
        $region40: #{tpu_custom_call.1} parent=35 // pred_fallthru
          _
      $region36: #{tpu_custom_call.1} parent=5 // pred_fallthru
        _
    $region6: #{tpu_custom_call.1} parent=1 // loop_footer
      %s14 = sadd.s32 1, %s10
    $region7: #{tpu_custom_call.1} parent=1 // loop_footer_branch
      %9 = sbr.rel target = $region3
    $region8: #{tpu_custom_call.1} parent=1 // loop_exit
      _
    %426 = vsyncpa [#allocation4], 1
    %s427 = scalar_lea.sflag [#allocation4], 1
    %428 = vsyncpa %s427, 1

</llo_original>
